<compile_context>
chip_gen: v7x
topology: tpu7x:2x2x1
jax: 0.10.0
libtpu: 0.0.40
codegen_flags: <defaults>
</compile_context>

<pallas_src>
import functools

import jax
import jax.numpy as jnp
from jax import lax
from jax.experimental import pallas as pl
from jax.experimental.pallas import tpu as pltpu


# --------------------------------- kernels ----------------------------------

def _hidden_kernel(x_ref, w_ref, h_ref, acc_ref, *, compute_dtype):
    """hidden tile = X tile @ W.weight.T, K-tiled over the vocab axis.

    x_ref:   (tb, tk)  X batch x vocab-chunk tile
    w_ref:   (E, tk)   W.weight chunk (native PyTorch [E, V] layout)
    h_ref:   (tb, E)   hidden output tile (f32)
    acc_ref: (tb, E)   f32 accumulator scratch
    """
    @pl.when(pl.program_id(1) == 0)
    def _():
        acc_ref[...] = jnp.zeros_like(acc_ref)

    # Cast on the tile inside the kernel (cheap VPU work); inputs stream from HBM at
    # their stored dtype — no wrapper-side cast pass.
    x = x_ref[...].astype(compute_dtype)
    w = w_ref[...].astype(compute_dtype)
    # (tb, tk) x (E, tk) contracted on the last dims -> (tb, E), i.e. X @ W.T on the MXU.
    acc_ref[...] += lax.dot_general(
        x, w, dimension_numbers=(((1,), (1,)), ((), ())),
        preferred_element_type=jnp.float32)

    @pl.when(pl.program_id(1) == pl.num_programs(1) - 1)
    def _():
        h_ref[...] = acc_ref[...].astype(h_ref.dtype)


def _logits_kernel(h_ref, wt_ref, o_ref, *, compute_dtype):
    """logits tile = hidden tile @ WT.weight.T.

    h_ref:  (tb, E)   hidden batch tile (f32; cast to compute_dtype at the MXU input)
    wt_ref: (tn, E)   WT.weight vocab tile (native PyTorch [V, E] layout)
    o_ref:  (tb, tn)  lane-dense logits tile
    """
    h = h_ref[...].astype(compute_dtype)
    wt = wt_ref[...].astype(compute_dtype)
    # (tb, E) x (tn, E) contracted on the last dims -> (tb, tn), i.e. hidden @ WT.T.
    o_ref[...] = lax.dot_general(
        h, wt, dimension_numbers=(((1,), (1,)), ((), ())),
        preferred_element_type=jnp.float32).astype(o_ref.dtype)


# --------------------------------- helpers ----------------------------------

def _pick_tile(dim, target, aligns=(128, 8)):
    """Largest tile <= target that divides dim and is a multiple of one of `aligns`
    (largest alignment preferred); falls back to the full dimension."""
    if dim <= target:
        return dim
    for align in aligns:
        if dim % align != 0:
            continue
        t = (min(target, dim) // align) * align
        while t >= align:
            if dim % t == 0:
                return t
            t -= align
    return dim


def _vmem_limit_bytes(tile_bytes):
    """Scoped-VMEM request: actual per-step tile bytes with 1.5x headroom, floored at
    32 MiB and capped at ~85% of physical per-core VMEM (≈56 MiB on 64 MiB v7x parts,
    ≈108 MiB on 128 MiB v5e/v6e parts) so Mosaic internal scratch always has room."""
    try:
        cap_phys = int(getattr(pltpu.get_tpu_info(), "vmem_capacity_bytes", 0)) or (64 << 20)
    except Exception:  # query unavailable -> assume the tightest (v7x) budget
        cap_phys = 64 << 20
    cap = int(cap_phys * 0.85)
    return int(min(cap, max(32 << 20, int(1.5 * tile_bytes))))


# --------------------------------- wrappers ---------------------------------

def _project_to_vocab(hidden, wt_weight, *, tile_b, tile_n, compute_dtype, out_dtype):
    """logits = hidden @ WT.weight.T, tiled (B/tb, V/tn); shared by both paths."""
    B, E = hidden.shape
    V, Ew = wt_weight.shape
    assert Ew == E

    tb = _pick_tile(B, tile_b, (128, 8))
    tn = _pick_tile(V, tile_n, (128,))

    vmem = _vmem_limit_bytes(
        2 * tb * E * hidden.dtype.itemsize              # hidden tile (double-buffered)
        + 2 * tn * E * wt_weight.dtype.itemsize         # WT vocab tile (double-buffered)
        + 2 * tb * tn * jnp.dtype(out_dtype).itemsize)  # output tile (double-buffered)

    # TODO(synk): if the consumer is softmax cross-entropy over the vocab, fuse the
    # row-max / logsumexp / label-logit reduction here so the [B, V] logits never hit
    # HBM (the logits writeback is the dominant stream); out_dtype=bfloat16 already
    # halves it when the full logits are required.
    return pl.pallas_call(
        functools.partial(_logits_kernel, compute_dtype=compute_dtype),
        out_shape=jax.ShapeDtypeStruct((B, V), out_dtype),
        grid_spec=pltpu.PrefetchScalarGridSpec(
            num_scalar_prefetch=0,
            grid=(B // tb, V // tn),
            in_specs=[
                # hidden tile: constant over the vocab axis, but tiny (tb*E), so the
                # default double buffer costs nothing (the review's Buffered(1) concern
                # targeted the old resident-W^T design, eliminated by K-tiling).
                pl.BlockSpec((tb, E), lambda i, j: (i, 0)),
                # WT.weight consumed in its native [V, E] layout — no wrapper transpose.
                pl.BlockSpec((tn, E), lambda i, j: (j, 0)),
            ],
            out_specs=pl.BlockSpec((tb, tn), lambda i, j: (i, j)),
        ),
        compiler_params=pltpu.CompilerParams(
            # Both axes independent -> megacore shards freely (v7x: 2 TensorCores).
            dimension_semantics=("parallel", "parallel"),
            vmem_limit_bytes=vmem,
        ),
    )(hidden, wt_weight)


def word2vec_forward(x, w_weight, wt_weight, *, tile_b=128, tile_n=1024, tile_k=512,
                     compute_dtype=None, out_dtype=None):
    """Forward pass of the PyTorch Word2Vec module for dense X.

    x:         [B, V]  dense input (e.g. one-hot rows)
    w_weight:  [E, V]  W.weight  (native PyTorch Linear layout — NOT transposed here)
    wt_weight: [V, E]  WT.weight (native layout)
    returns    [B, V]  logits (out_dtype; default x.dtype to match the module).

    compute_dtype=jnp.bfloat16 casts the MXU input tiles in-kernel (f32 accumulation,
    f32 hidden); out_dtype=jnp.bfloat16 halves the [B, V] logits writeback.
    Tiling notes: tile_b=128 is MXU-native on v5e; raise to 256 on v6e/v7x when
    B/tile_b >= 2 (on v7x keep >= 2 batch tiles so both TensorCores stay busy); on
    128 MiB VMEM parts tile_n can go to 2048.
    """
    B, V = x.shape
    E, Vw = w_weight.shape
    assert Vw == V and wt_weight.shape == (V, E)

    cdt = x.dtype if compute_dtype is None else jnp.dtype(compute_dtype)
    odt = x.dtype if out_dtype is None else jnp.dtype(out_dtype)

    tb = _pick_tile(B, tile_b, (128, 8))
    tk = _pick_tile(V, tile_k, (128,))

    vmem1 = _vmem_limit_bytes(
        2 * tb * tk * x.dtype.itemsize              # X tile (double-buffered)
        + 2 * E * tk * w_weight.dtype.itemsize      # W chunk (double-buffered)
        + 2 * tb * E * 4                            # hidden output tile
        + tb * E * 4)                               # f32 accumulator scratch

    # ---- matmul 1: hidden = X @ W.weight.T, K-tiled over the vocab axis -----------
    hidden = pl.pallas_call(
        functools.partial(_hidden_kernel, compute_dtype=cdt),
        out_shape=jax.ShapeDtypeStruct((B, E), jnp.float32),   # hidden kept in f32
        grid_spec=pltpu.PrefetchScalarGridSpec(
            num_scalar_prefetch=0,
            grid=(B // tb, V // tk),
            in_specs=[
                pl.BlockSpec((tb, tk), lambda i, k: (i, k)),   # X tile
                pl.BlockSpec((E, tk), lambda i, k: (0, k)),    # W.weight chunk ([E, V])
            ],
            out_specs=pl.BlockSpec((tb, E), lambda i, k: (i, 0)),
            scratch_shapes=[pltpu.VMEM((tb, E), jnp.float32)],
        ),
        compiler_params=pltpu.CompilerParams(
            dimension_semantics=("parallel", "arbitrary"),     # reduction axis last
            vmem_limit_bytes=vmem1,
        ),
    )(x, w_weight)

    # ---- matmul 2: logits = hidden @ WT.weight.T -----------------------------------
    return _project_to_vocab(hidden, wt_weight, tile_b=tile_b, tile_n=tile_n,
                             compute_dtype=cdt, out_dtype=odt)


def word2vec_forward_onehot(tokens, w_weight, wt_weight, *, tile_b=128, tile_n=1024,
                            compute_dtype=None, out_dtype=jnp.float32):
    """Fast path for one-hot X (the skip-gram training case).

    hidden[b] = W.weight[:, tokens[b]] — a tiny column gather in the native [E, V]
    layout (no [V, E] transpose of the full weight is materialized, and the [B, V]
    one-hot matrix / first matmul are eliminated); the kernel is one tiled
    [tb, E] @ [tn, E]^T MXU matmul producing lane-dense logits tiles.
    """
    (B,) = tokens.shape
    E, V = w_weight.shape
    assert wt_weight.shape == (V, E)
    cdt = w_weight.dtype if compute_dtype is None else jnp.dtype(compute_dtype)
    hidden = jnp.take(w_weight, tokens, axis=1).T.astype(jnp.float32)   # [B, E], tiny
    return _project_to_vocab(hidden, wt_weight, tile_b=tile_b, tile_n=tile_n,
                             compute_dtype=cdt, out_dtype=jnp.dtype(out_dtype))


def word2vec_reference(x, w_weight, wt_weight):
    hidden = x @ w_weight.T
    return hidden @ wt_weight.T


# ----------------------------------- test ------------------------------------

if __name__ == "__main__":
    # Small but tiling-exercising shapes: 2 batch tiles x 2 vocab output tiles,
    # 4 vocab reduction tiles in the dense path.
    voc_size = 2048
    embedding_size = 128
    batch = 256

    key = jax.random.PRNGKey(0)
    k_tok, k_w, k_wt = jax.random.split(key, 3)

    tokens = jax.random.randint(k_tok, (batch,), 0, voc_size)
    x = jax.nn.one_hot(tokens, voc_size, dtype=jnp.float32)                          # [B, V]
    w_weight = jax.random.normal(k_w, (embedding_size, voc_size), jnp.float32) * 0.1   # W.weight
    wt_weight = jax.random.normal(k_wt, (voc_size, embedding_size), jnp.float32) * 0.1  # WT.weight

    ref = word2vec_reference(x, w_weight, wt_weight)

    # 1) General dense-X path (f32, K-tiled first matmul).
    out = jax.block_until_ready(word2vec_forward(x, w_weight, wt_weight))
    assert out.shape == (batch, voc_size)
    assert jnp.allclose(out, ref, atol=1e-2, rtol=1e-2), "dense path mismatch"

    # 2) One-hot fast path (column gather + single tiled matmul, f32).
    out_oh = jax.block_until_ready(word2vec_forward_onehot(tokens, w_weight, wt_weight))
    assert out_oh.shape == (batch, voc_size)
    assert jnp.allclose(out_oh, ref, atol=1e-2, rtol=1e-2), "one-hot path mismatch"

    # 3) bf16 MXU inputs (f32 accumulation + f32 hidden) — loose tolerance vs f32 ref.
    out_bf16 = jax.block_until_ready(
        word2vec_forward(x, w_weight, wt_weight, compute_dtype=jnp.bfloat16))
    assert jnp.allclose(out_bf16, ref, atol=2e-2, rtol=2e-2), "bf16 compute mismatch"

    # 4) bf16 logits writeback (halves the dominant [B, V] HBM stream).
    out_bf16o = jax.block_until_ready(
        word2vec_forward_onehot(tokens, w_weight, wt_weight,
                                compute_dtype=jnp.bfloat16, out_dtype=jnp.bfloat16))
    assert jnp.allclose(out_bf16o.astype(jnp.float32), ref, atol=3e-2, rtol=3e-2), \
        "bf16 output mismatch"

    print("KERNEL_OK")
</pallas_src>

<mosaic_0001>
module attributes {stable_mosaic.version = 11 : i64} {
  func.func @_hidden_kernel(%arg0: i32, %arg1: i32, %arg2: memref<128x512xf32, #tpu.memory_space<vmem>>, %arg3: memref<128x512xf32, #tpu.memory_space<vmem>>, %arg4: memref<128x128xf32, #tpu.memory_space<vmem>>, %arg5: memref<128x128xf32, #tpu.memory_space<vmem>>) attributes {dimension_semantics = [#tpu.dimension_semantics<parallel>, #tpu.dimension_semantics<arbitrary>], iteration_bounds = array<i64: 2, 4>, scalar_prefetch = 0 : i64, scratch_operands = 1 : i64, tpu.core_type = #tpu.core_type<tc>, window_params = [{transform_indices = @transform_0, window_bounds = array<i64: 128, 512>}, {transform_indices = @transform_1, window_bounds = array<i64: 128, 512>}, {transform_indices = @transform_2, window_bounds = array<i64: 128, 128>}]} {
    %c0_i32 = arith.constant 0 : i32
    %0 = arith.cmpi eq, %arg1, %c0_i32 : i32
    %1 = arith.extui %0 : i1 to i32
    %c0_i32_0 = arith.constant 0 : i32
    %2 = arith.cmpi ne, %1, %c0_i32_0 : i32
    scf.if %2 {
      %cst_9 = arith.constant 0.000000e+00 : f32
      %12 = vector.broadcast %cst_9 : f32 to vector<128x128xf32>
      %c0_10 = arith.constant 0 : index
      %c0_11 = arith.constant 0 : index
      %13 = vector.load %arg5[%c0_10, %c0_11] : memref<128x128xf32, #tpu.memory_space<vmem>>, vector<128x128xf32>
      tpu.vector_store %arg5[%c0_10, %c0_11], %12 {strides = array<i32>} : memref<128x128xf32, #tpu.memory_space<vmem>>, vector<128x128xf32>,
    } else {
    }
    %c0 = arith.constant 0 : index
    %c0_1 = arith.constant 0 : index
    %3 = vector.load %arg2[%c0, %c0_1] : memref<128x512xf32, #tpu.memory_space<vmem>>, vector<128x512xf32>
    %c0_2 = arith.constant 0 : index
    %c0_3 = arith.constant 0 : index
    %4 = vector.load %arg3[%c0_2, %c0_3] : memref<128x512xf32, #tpu.memory_space<vmem>>, vector<128x512xf32>
    %c0_4 = arith.constant 0 : index
    %c0_5 = arith.constant 0 : index
    %5 = vector.load %arg5[%c0_4, %c0_5] : memref<128x128xf32, #tpu.memory_space<vmem>>, vector<128x128xf32>
    %cst = arith.constant dense<0.000000e+00> : vector<128x128xf32>
    %6 = tpu.matmul %3, %4, %cst {dimension_numbers = #tpu.dot_dimension_numbers<[1], [1], [0], [0], [0, 0, 1, 0], [], []>} : vector<128x512xf32>, vector<128x512xf32>, vector<128x128xf32> -> vector<128x128xf32>
    %7 = arith.addf %5, %6 : vector<128x128xf32>
    %c0_6 = arith.constant 0 : index
    %c0_7 = arith.constant 0 : index
    %8 = vector.load %arg5[%c0_6, %c0_7] : memref<128x128xf32, #tpu.memory_space<vmem>>, vector<128x128xf32>
    tpu.vector_store %arg5[%c0_6, %c0_7], %7 {strides = array<i32>} : memref<128x128xf32, #tpu.memory_space<vmem>>, vector<128x128xf32>,
    %c3_i32 = arith.constant 3 : i32
    %9 = arith.cmpi eq, %arg1, %c3_i32 : i32
    %10 = arith.extui %9 : i1 to i32
    %c0_i32_8 = arith.constant 0 : i32
    %11 = arith.cmpi ne, %10, %c0_i32_8 : i32
    scf.if %11 {
      %c0_9 = arith.constant 0 : index
      %c0_10 = arith.constant 0 : index
      %12 = vector.load %arg5[%c0_9, %c0_10] : memref<128x128xf32, #tpu.memory_space<vmem>>, vector<128x128xf32>
      %c0_11 = arith.constant 0 : index
      %c0_12 = arith.constant 0 : index
      %13 = vector.load %arg4[%c0_11, %c0_12] : memref<128x128xf32, #tpu.memory_space<vmem>>, vector<128x128xf32>
      tpu.vector_store %arg4[%c0_11, %c0_12], %12 {strides = array<i32>} : memref<128x128xf32, #tpu.memory_space<vmem>>, vector<128x128xf32>,
    } else {
    }
    return
  }
  func.func @transform_0(%arg0: i32, %arg1: i32) -> (i32, i32) {
    %c0_i32 = arith.constant 0 : i32
    return %arg0, %arg1 : i32, i32
  }
  func.func @transform_1(%arg0: i32, %arg1: i32) -> (i32, i32) {
    %c0_i32 = arith.constant 0 : i32
    %c0_i32_0 = arith.constant 0 : i32
    return %c0_i32, %arg1 : i32, i32
  }
  func.func @transform_2(%arg0: i32, %arg1: i32) -> (i32, i32) {
    %c0_i32 = arith.constant 0 : i32
    %c0_i32_0 = arith.constant 0 : i32
    return %arg0, %c0_i32 : i32, i32
  }
}

</mosaic_0001>

<llo_original>
// kernel: tpu_custom_call.1
$region0: #{tpu_custom_call.1}
  #allocation0 [shape = 'u32[]', space=smem, size = 0x4, offset = 0x4, fixed_abs, tag = 'smem constant byte address 0x4 - core index']
  #allocation1 [shape = 'u32[144,128]{1,0:T(1,128)}', space=vmem, size = 0x12000, scoped, tag = 'internal scratch']
  #allocation2 [shape = 'f32[128,128]{1,0:T(8,128)}', space=vmem, size = 0x10000, scoped, tag = 'scratch operand']
  %s0 = inlined_call_operand.hbm [shape: f32[256,2048], index: 0, kind: input, shape index: {}]
  %s1 = inlined_call_operand.hbm [shape: f32[128,2048], index: 1, kind: input, shape index: {}]
  %s2 = inlined_call_operand.hbm [shape: f32[256,128], index: 2, kind: output, shape index: {}]
  %s3 = sld [smem:[#allocation0]]
  $region57: #{tpu_custom_call.1} parent=0
    _
  %s5 = ssub.s32 1, %s3
  %s6 = scalar_select 0, %s5, %s3
  $region1: #{tpu_custom_call.1} parent=0
    #allocation3 [shape = 'u8[524288]{0}', space=vmem, size = 0x80000, scoped, tag = 'input window, operand 0']
    #allocation4 [shape = 's32[2]{0}', space=sflag, size = 0x8, scoped, tag = 'scoped memory for tpu_custom_call.1']
    #allocation5 [shape = 's32[2]{0}', space=sflag, size = 0x8, scoped, tag = 'scoped memory for tpu_custom_call.1']
    #allocation6 [shape = 'u8[524288]{0}', space=vmem, size = 0x80000, scoped, tag = 'input window, operand 1']
    #allocation7 [shape = 's32[2]{0}', space=sflag, size = 0x8, scoped, tag = 'scoped memory for tpu_custom_call.1']
    #allocation8 [shape = 'u8[131072]{0}', space=vmem, size = 0x20000, scoped, tag = 'output window, operand 0']
    %7 = vsyncpa [#allocation4], 0
    %s8 = scalar_lea.sflag [#allocation4], 1
    %9 = vsyncpa %s8, 0
    %10 = vsyncpa [#allocation7], 0
    %s11 = scalar_lea.sflag [#allocation7], 1
    %12 = vsyncpa %s11, 0
    %13 = vsyncpa [#allocation5], 0
    %s14 = scalar_lea.sflag [#allocation5], 1
    %15 = vsyncpa %s14, 0
    loop: start=0, step=1, limit=10
    $region2: #{tpu_custom_call.1} parent=1 // loop_pre_header
      _
    $region3: #{tpu_custom_call.1} parent=1 // loop_header
      %s17 = sphi 0, %s21
      %p18 = scmp.ge.s32.totalorder %s17, 10
      %s24 = sphi 0, %s36
      %s25 = sphi 0, %s32
      %s26 = sphi 0, %s24
      %s27 = sphi 0, %s25
      %s28 = sphi 0, %s26
      %s29 = sphi 0, %s27
      %s41 = sphi 0, %s43
      %s44 = sphi 0, %s41
      %s45 = sphi 0, %s44
      %s61 = sphi 0, %s45
      %s67 = sphi 0, %s69
      %s70 = sphi 0, %s67
      %s71 = sphi 0, %s70
      %s87 = sphi 0, %s71
      %s93 = sphi 0, %s95
      %s96 = sphi 0, %s93
      %s97 = sphi 0, %s96
      %s113 = sphi 0, %s97
    $region4: #{tpu_custom_call.1} parent=1 // loop_header_branch
      %20 = sbr.rel (%p18) target = $region8
    $region5: #{tpu_custom_call.1} parent=1 // loop_body
      %s22 = ssub.s32 %s17, 1
      %s23 = ssub.s32 %s17, 2
      %s30 = sadd.s32 1, %s25
      %p31 = scmp.ge.s32.totalorder %s30, 4
      %s32 = scalar_select %p31, 0, %s30
      %s33 = sadd.s32 1, %s24
      %s34 = scalar_select %p31, %s33, %s24
      %p35 = scmp.ge.s32.totalorder %s34, 2
      %s36 = scalar_select %p35, 0, %s34
      %s37 = ssub.s32 %s24, %s36
      %s38 = ssub.s32 %s25, %s32
      %s39 = sor.u32 %s37, %s38
      %p40 = scmp.eq.s32.totalorder %s39, 0
      %s42 = sadd.s32 %s41, 1
      %s43 = scalar_select %p40, %s41, %s42
      %p46 = pneg %p40
      %p47 = scmp.eq.s32.totalorder %s17, 7
      %p48 = por %p46, %p47
      %p49 = scmp.ne.s32.totalorder %s41, %s44
      %p50 = scmp.eq.s32.totalorder %s17, 0
      %p51 = por %p49, %p50
      %p52 = scmp.ne.s32.totalorder %s41, %s44
      %p53 = scmp.eq.s32.totalorder %s22, 7
      %p54 = por %p52, %p53
      %p55 = scmp.ne.s32.totalorder %s44, %s45
      %p56 = scmp.eq.s32.totalorder %s22, 0
      %p57 = por %p55, %p56
      %p58 = scmp.ne.s32.totalorder %s44, %s45
      %p59 = scmp.eq.s32.totalorder %s23, 7
      %p60 = por %p58, %p59
      %p62 = scmp.ne.s32.totalorder %s45, %s61
      %p63 = scmp.eq.s32.totalorder %s23, 0
      %p64 = por %p62, %p63
      %s65 = ssub.s32 %s25, %s32
      %p66 = scmp.eq.s32.totalorder %s65, 0
      %s68 = sadd.s32 %s67, 1
      %s69 = scalar_select %p66, %s67, %s68
      %p72 = pneg %p66
      %p73 = scmp.eq.s32.totalorder %s17, 7
      %p74 = por %p72, %p73
      %p75 = scmp.ne.s32.totalorder %s67, %s70
      %p76 = scmp.eq.s32.totalorder %s17, 0
      %p77 = por %p75, %p76
      %p78 = scmp.ne.s32.totalorder %s67, %s70
      %p79 = scmp.eq.s32.totalorder %s22, 7
      %p80 = por %p78, %p79
      %p81 = scmp.ne.s32.totalorder %s70, %s71
      %p82 = scmp.eq.s32.totalorder %s22, 0
      %p83 = por %p81, %p82
      %p84 = scmp.ne.s32.totalorder %s70, %s71
      %p85 = scmp.eq.s32.totalorder %s23, 7
      %p86 = por %p84, %p85
      %p88 = scmp.ne.s32.totalorder %s71, %s87
      %p89 = scmp.eq.s32.totalorder %s23, 0
      %p90 = por %p88, %p89
      %s91 = ssub.s32 %s24, %s36
      %p92 = scmp.eq.s32.totalorder %s91, 0
      %s94 = sadd.s32 %s93, 1
      %s95 = scalar_select %p92, %s93, %s94
      %p98 = pneg %p92
      %p99 = scmp.eq.s32.totalorder %s17, 7
      %p100 = por %p98, %p99
      %p101 = scmp.ne.s32.totalorder %s93, %s96
      %p102 = scmp.eq.s32.totalorder %s17, 0
      %p103 = por %p101, %p102
      %p104 = scmp.ne.s32.totalorder %s93, %s96
      %p105 = scmp.eq.s32.totalorder %s22, 7
      %p106 = por %p104, %p105
      %p107 = scmp.ne.s32.totalorder %s96, %s97
      %p108 = scmp.eq.s32.totalorder %s22, 0
      %p109 = por %p107, %p108
      %p110 = scmp.ne.s32.totalorder %s96, %s97
      %p111 = scmp.eq.s32.totalorder %s23, 7
      %p112 = por %p110, %p111
      %p114 = scmp.ne.s32.totalorder %s97, %s113
      %p115 = scmp.eq.s32.totalorder %s23, 0
      %p116 = por %p114, %p115
      %p117 = scmp.le.s32.totalorder 1, %s17
      %p118 = scmp.lt.s32.totalorder %s17, 9
      %p119 = pnand %p117, %p118
      %p120 = pneg %p119
      // Predicated region
      $region9: #{tpu_custom_call.1} parent=5 // pred_check
        _
      $region10: #{tpu_custom_call.1} parent=5 // pred_check_branch
        %122 = sbr.rel (%p119) target = $region12
      $region11: #{tpu_custom_call.1} parent=5 // pred_region
        %s123 = ssub.s32 %s17, 1
      $region12: #{tpu_custom_call.1} parent=5 // pred_fallthru
        _
      %p124 = scmp.lt.s32.totalorder %s17, 8
      // Predicated region
      $region13: #{tpu_custom_call.1} parent=5 // pred_check
        %p125 = pneg %p124
      $region14: #{tpu_custom_call.1} parent=5 // pred_check_branch
        %127 = sbr.rel (%p125) target = $region16
      $region15: #{tpu_custom_call.1} parent=5 // pred_region
        // Predicated region
        $region17: #{tpu_custom_call.1} parent=15 // pred_check
          %p128 = pneg %p51
        $region18: #{tpu_custom_call.1} parent=15 // pred_check_branch
          %130 = sbr.rel (%p128) target = $region20
        $region19: #{tpu_custom_call.1} parent=15 // pred_region
          %s131 = sand.u32 %s41, 1
          %s132 = scalar_lea.sflag [#allocation4], %s131
          %s133 = sand.u32 %s41, 1
          %s134 = smul.addr %s133, 512
          %s135 = scalar_lea.vmem [#allocation3], %s134
          %s136 = smul.u32 16, %s24
          %s137 = smul.u32 4, %s25
          %s139 = ssub.s32 8192, 8192
          %140 = vsyncadd %s132, %s139
          %s141 = smul.addr %s136, 16
          %s142 = sadd.s32 %s137, %s141
          %s143 = smul.addr %s142, 128
          %s144 = scalar_lea.hbm %s0, %s143
          %s145 = sshll.u32 %s135, 4
          %s146 = int_to_ptr.vmem [resolvable:$true] %s145
          %151 = dma.hbm_to_vmem [thread:$0]  %s144, 8192, %s146, %s132, 2048, 512, 32
        $region20: #{tpu_custom_call.1} parent=15 // pred_fallthru
          _
        // Predicated region
        $region21: #{tpu_custom_call.1} parent=15 // pred_check
          %p152 = pneg %p77
        $region22: #{tpu_custom_call.1} parent=15 // pred_check_branch
          %154 = sbr.rel (%p152) target = $region24
        $region23: #{tpu_custom_call.1} parent=15 // pred_region
          %s155 = sand.u32 %s67, 1
          %s156 = scalar_lea.sflag [#allocation7], %s155
          %s157 = sand.u32 %s67, 1
          %s158 = smul.addr %s157, 512
          %s159 = scalar_lea.vmem [#allocation6], %s158
          %s160 = smul.u32 4, %s25
          %s162 = ssub.s32 8192, 8192
          %163 = vsyncadd %s156, %s162
          %s164 = smul.addr %s160, 128
          %s165 = scalar_lea.hbm %s1, %s164
          %s166 = sshll.u32 %s159, 4
          %s167 = int_to_ptr.vmem [resolvable:$true] %s166
          %172 = dma.hbm_to_vmem [thread:$0]  %s165, 8192, %s167, %s156, 2048, 512, 32
        $region24: #{tpu_custom_call.1} parent=15 // pred_fallthru
          _
      $region16: #{tpu_custom_call.1} parent=5 // pred_fallthru
        _
      %p173 = scmp.le.s32.totalorder 1, %s17
      %p174 = scmp.lt.s32.totalorder %s17, 9
      %p175 = pnand %p173, %p174
      %p176 = pneg %p175
      // Predicated region
      $region25: #{tpu_custom_call.1} parent=5 // pred_check
        _
      $region26: #{tpu_custom_call.1} parent=5 // pred_check_branch
        %178 = sbr.rel (%p175) target = $region28
      $region27: #{tpu_custom_call.1} parent=5 // pred_region
        %s179 = ssub.s32 %s17, 1
        %s180 = sand.u32 %s44, 1
        %s181 = scalar_lea.sflag [#allocation4], %s180
        %s182 = sand.u32 %s44, 1
        %s183 = smul.addr %s182, 512
        %s184 = scalar_lea.vmem [#allocation3], %s183
        // Predicated region
        $region29: #{tpu_custom_call.1} parent=27 // pred_check
          %p185 = pneg %p57
        $region30: #{tpu_custom_call.1} parent=27 // pred_check_branch
          %187 = sbr.rel (%p185) target = $region32
        $region31: #{tpu_custom_call.1} parent=27 // pred_region
          %188 = dma.done %s181, 8192
        $region32: #{tpu_custom_call.1} parent=27 // pred_fallthru
          _
        %s189 = sand.u32 %s70, 1
        %s190 = scalar_lea.sflag [#allocation7], %s189
        %s191 = sand.u32 %s70, 1
        %s192 = smul.addr %s191, 512
        %s193 = scalar_lea.vmem [#allocation6], %s192
        // Predicated region
        $region33: #{tpu_custom_call.1} parent=27 // pred_check
          %p194 = pneg %p83
        $region34: #{tpu_custom_call.1} parent=27 // pred_check_branch
          %196 = sbr.rel (%p194) target = $region36
        $region35: #{tpu_custom_call.1} parent=27 // pred_region
          %197 = dma.done %s190, 8192
        $region36: #{tpu_custom_call.1} parent=27 // pred_fallthru
          _
        %s198 = sand.u32 %s44, 1
        %s199 = scalar_lea.sflag [#allocation4], %s198
        %s200 = sand.u32 %s44, 1
        %s201 = smul.addr %s200, 512
        %s202 = scalar_lea.vmem [#allocation3], %s201
        %p203 = pneg %p57
        %p204 = pneg %p54
        %s205 = sand.u32 %s70, 1
        %s206 = scalar_lea.sflag [#allocation7], %s205
        %s207 = sand.u32 %s70, 1
        %s208 = smul.addr %s207, 512
        %s209 = scalar_lea.vmem [#allocation6], %s208
        %p210 = pneg %p83
        %p211 = pneg %p80
        %p212 = pneg %p109
        %p213 = pneg %p106
        %s214 = sand.u32 %s96, 1
        %s215 = scalar_lea.sflag [#allocation5], %s214
        %s216 = sand.u32 %s96, 1
        %s217 = smul.addr %s216, 128
        %s218 = scalar_lea.vmem [#allocation8], %s217
        %s219 = smul.u32 16, %s26
        %s220 = smul.u32 4, %s27
        %s221 = smul.u32 4, %s27
        %s222 = smul.u32 16, %s26
        %p223 = scmp.eq.s32.totalorder %s27, 0
        // Predicated region
        $region37: #{tpu_custom_call.1} parent=27 // pred_check
          %p224 = pneg %p223
        $region38: #{tpu_custom_call.1} parent=27 // pred_check_branch
          %226 = sbr.rel (%p224) target = $region40
        $region39: #{tpu_custom_call.1} parent=27 // pred_region
          %227 = vst [vmem:[#allocation2] sm:$0xff] 0.0
          %228 = vst [vmem:[#allocation2 + $0x8] sm:$0xff] 0.0
          %229 = vst [vmem:[#allocation2 + $0x10] sm:$0xff] 0.0
          %230 = vst [vmem:[#allocation2 + $0x18] sm:$0xff] 0.0
          %231 = vst [vmem:[#allocation2 + $0x20] sm:$0xff] 0.0
          %232 = vst [vmem:[#allocation2 + $0x28] sm:$0xff] 0.0
          %233 = vst [vmem:[#allocation2 + $0x30] sm:$0xff] 0.0
          %234 = vst [vmem:[#allocation2 + $0x38] sm:$0xff] 0.0
          %235 = vst [vmem:[#allocation2 + $0x40] sm:$0xff] 0.0
          %236 = vst [vmem:[#allocation2 + $0x48] sm:$0xff] 0.0
          %237 = vst [vmem:[#allocation2 + $0x50] sm:$0xff] 0.0
          %238 = vst [vmem:[#allocation2 + $0x58] sm:$0xff] 0.0
          %239 = vst [vmem:[#allocation2 + $0x60] sm:$0xff] 0.0
          %240 = vst [vmem:[#allocation2 + $0x68] sm:$0xff] 0.0
          %241 = vst [vmem:[#allocation2 + $0x70] sm:$0xff] 0.0
          %242 = vst [vmem:[#allocation2 + $0x78] sm:$0xff] 0.0
        $region40: #{tpu_custom_call.1} parent=27 // pred_fallthru
          _
        %v243 = vld [vmem:[%s184] sm:$0xff]
        %v244 = vld [vmem:[%s184 + $0x8] sm:$0xff]
        %v245 = vld [vmem:[%s184 + $0x10] sm:$0xff]
        %v246 = vld [vmem:[%s184 + $0x18] sm:$0xff]
        %v247 = vld [vmem:[%s184 + $0x20] sm:$0xff]
        %v248 = vld [vmem:[%s184 + $0x28] sm:$0xff]
        %v249 = vld [vmem:[%s184 + $0x30] sm:$0xff]
        %v250 = vld [vmem:[%s184 + $0x38] sm:$0xff]
        %v251 = vld [vmem:[%s184 + $0x40] sm:$0xff]
        %v252 = vld [vmem:[%s184 + $0x48] sm:$0xff]
        %v253 = vld [vmem:[%s184 + $0x50] sm:$0xff]
        %v254 = vld [vmem:[%s184 + $0x58] sm:$0xff]
        %v255 = vld [vmem:[%s184 + $0x60] sm:$0xff]
        %v256 = vld [vmem:[%s184 + $0x68] sm:$0xff]
        %v257 = vld [vmem:[%s184 + $0x70] sm:$0xff]
        %v258 = vld [vmem:[%s184 + $0x78] sm:$0xff]
        %v259 = vld [vmem:[%s184 + $0x80] sm:$0xff]
        %v260 = vld [vmem:[%s184 + $0x88] sm:$0xff]
        %v261 = vld [vmem:[%s184 + $0x90] sm:$0xff]
        %v262 = vld [vmem:[%s184 + $0x98] sm:$0xff]
        %v263 = vld [vmem:[%s184 + $0xa0] sm:$0xff]
        %v264 = vld [vmem:[%s184 + $0xa8] sm:$0xff]
        %v265 = vld [vmem:[%s184 + $0xb0] sm:$0xff]
        %v266 = vld [vmem:[%s184 + $0xb8] sm:$0xff]
        %v267 = vld [vmem:[%s184 + $0xc0] sm:$0xff]
        %v268 = vld [vmem:[%s184 + $0xc8] sm:$0xff]
        %v269 = vld [vmem:[%s184 + $0xd0] sm:$0xff]
        %v270 = vld [vmem:[%s184 + $0xd8] sm:$0xff]
        %v271 = vld [vmem:[%s184 + $0xe0] sm:$0xff]
        %v272 = vld [vmem:[%s184 + $0xe8] sm:$0xff]
        %v273 = vld [vmem:[%s184 + $0xf0] sm:$0xff]
        %v274 = vld [vmem:[%s184 + $0xf8] sm:$0xff]
        %v275 = vld [vmem:[%s184 + $0x100] sm:$0xff]
        %v276 = vld [vmem:[%s184 + $0x108] sm:$0xff]
        %v277 = vld [vmem:[%s184 + $0x110] sm:$0xff]
        %v278 = vld [vmem:[%s184 + $0x118] sm:$0xff]
        %v279 = vld [vmem:[%s184 + $0x120] sm:$0xff]
        %v280 = vld [vmem:[%s184 + $0x128] sm:$0xff]
        %v281 = vld [vmem:[%s184 + $0x130] sm:$0xff]
        %v282 = vld [vmem:[%s184 + $0x138] sm:$0xff]
        %v283 = vld [vmem:[%s184 + $0x140] sm:$0xff]
        %v284 = vld [vmem:[%s184 + $0x148] sm:$0xff]
        %v285 = vld [vmem:[%s184 + $0x150] sm:$0xff]
        %v286 = vld [vmem:[%s184 + $0x158] sm:$0xff]
        %v287 = vld [vmem:[%s184 + $0x160] sm:$0xff]
        %v288 = vld [vmem:[%s184 + $0x168] sm:$0xff]
        %v289 = vld [vmem:[%s184 + $0x170] sm:$0xff]
        %v290 = vld [vmem:[%s184 + $0x178] sm:$0xff]
        %v291 = vld [vmem:[%s184 + $0x180] sm:$0xff]
        %v292 = vld [vmem:[%s184 + $0x188] sm:$0xff]
        %v293 = vld [vmem:[%s184 + $0x190] sm:$0xff]
        %v294 = vld [vmem:[%s184 + $0x198] sm:$0xff]
        %v295 = vld [vmem:[%s184 + $0x1a0] sm:$0xff]
        %v296 = vld [vmem:[%s184 + $0x1a8] sm:$0xff]
        %v297 = vld [vmem:[%s184 + $0x1b0] sm:$0xff]
        %v298 = vld [vmem:[%s184 + $0x1b8] sm:$0xff]
        %v299 = vld [vmem:[%s184 + $0x1c0] sm:$0xff]
        %v300 = vld [vmem:[%s184 + $0x1c8] sm:$0xff]
        %v301 = vld [vmem:[%s184 + $0x1d0] sm:$0xff]
        %v302 = vld [vmem:[%s184 + $0x1d8] sm:$0xff]
        %v303 = vld [vmem:[%s184 + $0x1e0] sm:$0xff]
        %v304 = vld [vmem:[%s184 + $0x1e8] sm:$0xff]
        %v305 = vld [vmem:[%s184 + $0x1f0] sm:$0xff]
        %v306 = vld [vmem:[%s184 + $0x1f8] sm:$0xff]
        %v307 = vld [vmem:[%s193] sm:$0xff]
        %v308 = vld [vmem:[%s193 + $0x8] sm:$0xff]
        %v309 = vld [vmem:[%s193 + $0x10] sm:$0xff]
        %v310 = vld [vmem:[%s193 + $0x18] sm:$0xff]
        %v311 = vld [vmem:[%s193 + $0x20] sm:$0xff]
        %v312 = vld [vmem:[%s193 + $0x28] sm:$0xff]
        %v313 = vld [vmem:[%s193 + $0x30] sm:$0xff]
        %v314 = vld [vmem:[%s193 + $0x38] sm:$0xff]
        %v315 = vld [vmem:[%s193 + $0x40] sm:$0xff]
        %v316 = vld [vmem:[%s193 + $0x48] sm:$0xff]
        %v317 = vld [vmem:[%s193 + $0x50] sm:$0xff]
        %v318 = vld [vmem:[%s193 + $0x58] sm:$0xff]
        %v319 = vld [vmem:[%s193 + $0x60] sm:$0xff]
        %v320 = vld [vmem:[%s193 + $0x68] sm:$0xff]
        %v321 = vld [vmem:[%s193 + $0x70] sm:$0xff]
        %v322 = vld [vmem:[%s193 + $0x78] sm:$0xff]
        %v323 = vld [vmem:[%s193 + $0x80] sm:$0xff]
        %v324 = vld [vmem:[%s193 + $0x88] sm:$0xff]
        %v325 = vld [vmem:[%s193 + $0x90] sm:$0xff]
        %v326 = vld [vmem:[%s193 + $0x98] sm:$0xff]
        %v327 = vld [vmem:[%s193 + $0xa0] sm:$0xff]
        %v328 = vld [vmem:[%s193 + $0xa8] sm:$0xff]
        %v329 = vld [vmem:[%s193 + $0xb0] sm:$0xff]
        %v330 = vld [vmem:[%s193 + $0xb8] sm:$0xff]
        %v331 = vld [vmem:[%s193 + $0xc0] sm:$0xff]
        %v332 = vld [vmem:[%s193 + $0xc8] sm:$0xff]
        %v333 = vld [vmem:[%s193 + $0xd0] sm:$0xff]
        %v334 = vld [vmem:[%s193 + $0xd8] sm:$0xff]
        %v335 = vld [vmem:[%s193 + $0xe0] sm:$0xff]
        %v336 = vld [vmem:[%s193 + $0xe8] sm:$0xff]
        %v337 = vld [vmem:[%s193 + $0xf0] sm:$0xff]
        %v338 = vld [vmem:[%s193 + $0xf8] sm:$0xff]
        %v339 = vld [vmem:[%s193 + $0x100] sm:$0xff]
        %v340 = vld [vmem:[%s193 + $0x108] sm:$0xff]
        %v341 = vld [vmem:[%s193 + $0x110] sm:$0xff]
        %v342 = vld [vmem:[%s193 + $0x118] sm:$0xff]
        %v343 = vld [vmem:[%s193 + $0x120] sm:$0xff]
        %v344 = vld [vmem:[%s193 + $0x128] sm:$0xff]
        %v345 = vld [vmem:[%s193 + $0x130] sm:$0xff]
        %v346 = vld [vmem:[%s193 + $0x138] sm:$0xff]
        %v347 = vld [vmem:[%s193 + $0x140] sm:$0xff]
        %v348 = vld [vmem:[%s193 + $0x148] sm:$0xff]
        %v349 = vld [vmem:[%s193 + $0x150] sm:$0xff]
        %v350 = vld [vmem:[%s193 + $0x158] sm:$0xff]
        %v351 = vld [vmem:[%s193 + $0x160] sm:$0xff]
        %v352 = vld [vmem:[%s193 + $0x168] sm:$0xff]
        %v353 = vld [vmem:[%s193 + $0x170] sm:$0xff]
        %v354 = vld [vmem:[%s193 + $0x178] sm:$0xff]
        %v355 = vld [vmem:[%s193 + $0x180] sm:$0xff]
        %v356 = vld [vmem:[%s193 + $0x188] sm:$0xff]
        %v357 = vld [vmem:[%s193 + $0x190] sm:$0xff]
        %v358 = vld [vmem:[%s193 + $0x198] sm:$0xff]
        %v359 = vld [vmem:[%s193 + $0x1a0] sm:$0xff]
        %v360 = vld [vmem:[%s193 + $0x1a8] sm:$0xff]
        %v361 = vld [vmem:[%s193 + $0x1b0] sm:$0xff]
        %v362 = vld [vmem:[%s193 + $0x1b8] sm:$0xff]
        %v363 = vld [vmem:[%s193 + $0x1c0] sm:$0xff]
        %v364 = vld [vmem:[%s193 + $0x1c8] sm:$0xff]
        %v365 = vld [vmem:[%s193 + $0x1d0] sm:$0xff]
        %v366 = vld [vmem:[%s193 + $0x1d8] sm:$0xff]
        %v367 = vld [vmem:[%s193 + $0x1e0] sm:$0xff]
        %v368 = vld [vmem:[%s193 + $0x1e8] sm:$0xff]
        %v369 = vld [vmem:[%s193 + $0x1f0] sm:$0xff]
        %v370 = vld [vmem:[%s193 + $0x1f8] sm:$0xff]
        %v371 = vld [vmem:[#allocation2] sm:$0xff]
        %v372 = vld [vmem:[#allocation2 + $0x8] sm:$0xff]
        %v373 = vld [vmem:[#allocation2 + $0x10] sm:$0xff]
        %v374 = vld [vmem:[#allocation2 + $0x18] sm:$0xff]
        %v375 = vld [vmem:[#allocation2 + $0x20] sm:$0xff]
        %v376 = vld [vmem:[#allocation2 + $0x28] sm:$0xff]
        %v377 = vld [vmem:[#allocation2 + $0x30] sm:$0xff]
        %v378 = vld [vmem:[#allocation2 + $0x38] sm:$0xff]
        %v379 = vld [vmem:[#allocation2 + $0x40] sm:$0xff]
        %v380 = vld [vmem:[#allocation2 + $0x48] sm:$0xff]
        %v381 = vld [vmem:[#allocation2 + $0x50] sm:$0xff]
        %v382 = vld [vmem:[#allocation2 + $0x58] sm:$0xff]
        %v383 = vld [vmem:[#allocation2 + $0x60] sm:$0xff]
        %v384 = vld [vmem:[#allocation2 + $0x68] sm:$0xff]
        %v385 = vld [vmem:[#allocation2 + $0x70] sm:$0xff]
        %v386 = vld [vmem:[#allocation2 + $0x78] sm:$0xff]
        %387 = vmatprep.subr.mxu0 %v308
        %388 = vmatpush1.xpose.msra.mxu0 %v307
        %389 = vmatprep.subr.mxu0 %v312
        %390 = vmatpush1.xpose.msra.mxu0 %v311
        %391 = vmatprep.subr.mxu0 %v316
        %392 = vmatpush1.xpose.msra.mxu0 %v315
        %393 = vmatprep.subr.mxu0 %v320
        %394 = vmatpush1.xpose.msra.mxu0 %v319
        %395 = vmatprep.subr.mxu0 %v324
        %396 = vmatpush1.xpose.msra.mxu0 %v323
        %397 = vmatprep.subr.mxu0 %v328
        %398 = vmatpush1.xpose.msra.mxu0 %v327
        %399 = vmatprep.subr.mxu0 %v332
        %400 = vmatpush1.xpose.msra.mxu0 %v331
        %401 = vmatprep.subr.mxu0 %v336
        %402 = vmatpush1.xpose.msra.mxu0 %v335
        %403 = vmatprep.subr.mxu0 %v340
        %404 = vmatpush1.xpose.msra.mxu0 %v339
        %405 = vmatprep.subr.mxu0 %v344
        %406 = vmatpush1.xpose.msra.mxu0 %v343
        %407 = vmatprep.subr.mxu0 %v348
        %408 = vmatpush1.xpose.msra.mxu0 %v347
        %409 = vmatprep.subr.mxu0 %v352
        %410 = vmatpush1.xpose.msra.mxu0 %v351
        %411 = vmatprep.subr.mxu0 %v356
        %412 = vmatpush1.xpose.msra.mxu0 %v355
        %413 = vmatprep.subr.mxu0 %v360
        %414 = vmatpush1.xpose.msra.mxu0 %v359
        %415 = vmatprep.subr.mxu0 %v364
        %416 = vmatpush1.xpose.msra.mxu0 %v363
        %417 = vmatprep.subr.mxu0 %v368
        %418 = vmatpush1.xpose.msra.mxu0 %v367
        %419 = vmatprep.subr.mxu0 0.0
        %420 = vmatpush1.xpose.msra.mxu0 0.0
        %421 = vmatprep.subr.mxu0 0.0
        %422 = vmatpush1.xpose.msra.mxu0 0.0
        %423 = vmatprep.subr.mxu0 0.0
        %424 = vmatpush1.xpose.msra.mxu0 0.0
        %425 = vmatprep.subr.mxu0 0.0
        %426 = vmatpush1.xpose.msra.mxu0 0.0
        %427 = vmatprep.subr.mxu0 0.0
        %428 = vmatpush1.xpose.msra.mxu0 0.0
        %429 = vmatprep.subr.mxu0 0.0
        %430 = vmatpush1.xpose.msra.mxu0 0.0
        %431 = vmatprep.subr.mxu0 0.0
        %432 = vmatpush1.xpose.msra.mxu0 0.0
        %433 = vmatprep.subr.mxu0 0.0
        %434 = vmatpush1.xpose.msra.mxu0 0.0
        %435 = vmatprep.subr.mxu0 0.0
        %436 = vmatpush1.xpose.msra.mxu0 0.0
        %437 = vmatprep.subr.mxu0 0.0
        %438 = vmatpush1.xpose.msra.mxu0 0.0
        %439 = vmatprep.subr.mxu0 0.0
        %440 = vmatpush1.xpose.msra.mxu0 0.0
        %441 = vmatprep.subr.mxu0 0.0
        %442 = vmatpush1.xpose.msra.mxu0 0.0
        %443 = vmatprep.subr.mxu0 0.0
        %444 = vmatpush1.xpose.msra.mxu0 0.0
        %445 = vmatprep.subr.mxu0 0.0
        %446 = vmatpush1.xpose.msra.mxu0 0.0
        %447 = vmatprep.subr.mxu0 0.0
        %448 = vmatpush1.xpose.msra.mxu0 0.0
        %449 = vmatprep.subr.mxu0 0.0
        %450 = vmatpush1.xpose.msra.mxu0 0.0
        %451 = vmatprep.mubr.f32.mxu0 %v244
        %452 = vmatmul.mubr.f32.gmra.mrb[0].mxu0 %v243
        %v453 = vpop.f32.mrb[0].mxu0
        %v454 = vadd.f32 0.0, %v453
        %v455 = vpop.f32.mrb[0].mxu0
        %456 = vmatprep.mubr.f32.mxu0 %v248
        %457 = vmatmul.mubr.f32.gmra.mrb[0].mxu0 %v247
        %v458 = vpop.f32.mrb[0].mxu0
        %v459 = vadd.f32 0.0, %v458
        %v460 = vpop.f32.mrb[0].mxu0
        %461 = vmatprep.mubr.f32.mxu0 %v252
        %462 = vmatmul.mubr.f32.gmra.mrb[0].mxu0 %v251
        %v463 = vpop.f32.mrb[0].mxu0
        %v464 = vadd.f32 0.0, %v463
        %v465 = vpop.f32.mrb[0].mxu0
        %466 = vmatprep.mubr.f32.mxu0 %v256
        %467 = vmatmul.mubr.f32.gmra.mrb[0].mxu0 %v255
        %v468 = vpop.f32.mrb[0].mxu0
        %v469 = vadd.f32 0.0, %v468
        %v470 = vpop.f32.mrb[0].mxu0
        %471 = vmatprep.mubr.f32.mxu0 %v260
        %472 = vmatmul.mubr.f32.gmra.mrb[0].mxu0 %v259
        %v473 = vpop.f32.mrb[0].mxu0
        %v474 = vadd.f32 0.0, %v473
        %v475 = vpop.f32.mrb[0].mxu0
        %476 = vmatprep.mubr.f32.mxu0 %v264
        %477 = vmatmul.mubr.f32.gmra.mrb[0].mxu0 %v263
        %v478 = vpop.f32.mrb[0].mxu0
        %v479 = vadd.f32 0.0, %v478
        %v480 = vpop.f32.mrb[0].mxu0
        %481 = vmatprep.mubr.f32.mxu0 %v268
        %482 = vmatmul.mubr.f32.gmra.mrb[0].mxu0 %v267
        %v483 = vpop.f32.mrb[0].mxu0
        %v484 = vadd.f32 0.0, %v483
        %v485 = vpop.f32.mrb[0].mxu0
        %486 = vmatprep.mubr.f32.mxu0 %v272
        %487 = vmatmul.mubr.f32.gmra.mrb[0].mxu0 %v271
        %v488 = vpop.f32.mrb[0].mxu0
        %v489 = vadd.f32 0.0, %v488
        %v490 = vpop.f32.mrb[0].mxu0
        %491 = vmatprep.mubr.f32.mxu0 %v276
        %492 = vmatmul.mubr.f32.gmra.mrb[0].mxu0 %v275
        %v493 = vpop.f32.mrb[0].mxu0
        %v494 = vadd.f32 0.0, %v493
        %v495 = vpop.f32.mrb[0].mxu0
        %496 = vmatprep.mubr.f32.mxu0 %v280
        %497 = vmatmul.mubr.f32.gmra.mrb[0].mxu0 %v279
        %v498 = vpop.f32.mrb[0].mxu0
        %v499 = vadd.f32 0.0, %v498
        %v500 = vpop.f32.mrb[0].mxu0
        %501 = vmatprep.mubr.f32.mxu0 %v284
        %502 = vmatmul.mubr.f32.gmra.mrb[0].mxu0 %v283
        %v503 = vpop.f32.mrb[0].mxu0
        %v504 = vadd.f32 0.0, %v503
        %v505 = vpop.f32.mrb[0].mxu0
        %506 = vmatprep.mubr.f32.mxu0 %v288
        %507 = vmatmul.mubr.f32.gmra.mrb[0].mxu0 %v287
        %v508 = vpop.f32.mrb[0].mxu0
        %v509 = vadd.f32 0.0, %v508
        %v510 = vpop.f32.mrb[0].mxu0
        %511 = vmatprep.mubr.f32.mxu0 %v292
        %512 = vmatmul.mubr.f32.gmra.mrb[0].mxu0 %v291
        %v513 = vpop.f32.mrb[0].mxu0
        %v514 = vadd.f32 0.0, %v513
        %v515 = vpop.f32.mrb[0].mxu0
        %516 = vmatprep.mubr.f32.mxu0 %v296
        %517 = vmatmul.mubr.f32.gmra.mrb[0].mxu0 %v295
        %v518 = vpop.f32.mrb[0].mxu0
        %v519 = vadd.f32 0.0, %v518
        %v520 = vpop.f32.mrb[0].mxu0
        %521 = vmatprep.mubr.f32.mxu0 %v300
        %522 = vmatmul.mubr.f32.gmra.mrb[0].mxu0 %v299
        %v523 = vpop.f32.mrb[0].mxu0
        %v524 = vadd.f32 0.0, %v523
        %v525 = vpop.f32.mrb[0].mxu0
        %526 = vmatprep.mubr.f32.mxu0 %v304
        %527 = vmatmul.mubr.f32.gmra.mrb[0].mxu0 %v303
        %v528 = vpop.f32.mrb[0].mxu0
        %v529 = vadd.f32 0.0, %v528
        %v530 = vpop.f32.mrb[0].mxu0
        %531 = vdwg.mxu0
        %532 = vmatprep.subr.mxu0 %v310
        %533 = vmatpush1.xpose.msra.mxu0 %v309
        %534 = vmatprep.subr.mxu0 %v314
        %535 = vmatpush1.xpose.msra.mxu0 %v313
        %536 = vmatprep.subr.mxu0 %v318
        %537 = vmatpush1.xpose.msra.mxu0 %v317
        %538 = vmatprep.subr.mxu0 %v322
        %539 = vmatpush1.xpose.msra.mxu0 %v321
        %540 = vmatprep.subr.mxu0 %v326
        %541 = vmatpush1.xpose.msra.mxu0 %v325
        %542 = vmatprep.subr.mxu0 %v330
        %543 = vmatpush1.xpose.msra.mxu0 %v329
        %544 = vmatprep.subr.mxu0 %v334
        %545 = vmatpush1.xpose.msra.mxu0 %v333
        %546 = vmatprep.subr.mxu0 %v338
        %547 = vmatpush1.xpose.msra.mxu0 %v337
        %548 = vmatprep.subr.mxu0 %v342
        %549 = vmatpush1.xpose.msra.mxu0 %v341
        %550 = vmatprep.subr.mxu0 %v346
        %551 = vmatpush1.xpose.msra.mxu0 %v345
        %552 = vmatprep.subr.mxu0 %v350
        %553 = vmatpush1.xpose.msra.mxu0 %v349
        %554 = vmatprep.subr.mxu0 %v354
        %555 = vmatpush1.xpose.msra.mxu0 %v353
        %556 = vmatprep.subr.mxu0 %v358
        %557 = vmatpush1.xpose.msra.mxu0 %v357
        %558 = vmatprep.subr.mxu0 %v362
        %559 = vmatpush1.xpose.msra.mxu0 %v361
        %560 = vmatprep.subr.mxu0 %v366
        %561 = vmatpush1.xpose.msra.mxu0 %v365
        %562 = vmatprep.subr.mxu0 %v370
        %563 = vmatpush1.xpose.msra.mxu0 %v369
        %564 = vmatprep.subr.mxu0 0.0
        %565 = vmatpush1.xpose.msra.mxu0 0.0
        %566 = vmatprep.subr.mxu0 0.0
        %567 = vmatpush1.xpose.msra.mxu0 0.0
        %568 = vmatprep.subr.mxu0 0.0
        %569 = vmatpush1.xpose.msra.mxu0 0.0
        %570 = vmatprep.subr.mxu0 0.0
        %571 = vmatpush1.xpose.msra.mxu0 0.0
        %572 = vmatprep.subr.mxu0 0.0
        %573 = vmatpush1.xpose.msra.mxu0 0.0
        %574 = vmatprep.subr.mxu0 0.0
        %575 = vmatpush1.xpose.msra.mxu0 0.0
        %576 = vmatprep.subr.mxu0 0.0
        %577 = vmatpush1.xpose.msra.mxu0 0.0
        %578 = vmatprep.subr.mxu0 0.0
        %579 = vmatpush1.xpose.msra.mxu0 0.0
        %580 = vmatprep.subr.mxu0 0.0
        %581 = vmatpush1.xpose.msra.mxu0 0.0
        %582 = vmatprep.subr.mxu0 0.0
        %583 = vmatpush1.xpose.msra.mxu0 0.0
        %584 = vmatprep.subr.mxu0 0.0
        %585 = vmatpush1.xpose.msra.mxu0 0.0
        %586 = vmatprep.subr.mxu0 0.0
        %587 = vmatpush1.xpose.msra.mxu0 0.0
        %588 = vmatprep.subr.mxu0 0.0
        %589 = vmatpush1.xpose.msra.mxu0 0.0
        %590 = vmatprep.subr.mxu0 0.0
        %591 = vmatpush1.xpose.msra.mxu0 0.0
        %592 = vmatprep.subr.mxu0 0.0
        %593 = vmatpush1.xpose.msra.mxu0 0.0
        %594 = vmatprep.subr.mxu0 0.0
        %595 = vmatpush1.xpose.msra.mxu0 0.0
        %596 = vmatprep.mubr.f32.mxu0 %v246
        %597 = vmatmul.mubr.f32.gmra.mrb[0].mxu0 %v245
        %v598 = vpop.f32.mrb[0].mxu0
        %v599 = vadd.f32 %v454, %v598
        %v600 = vpop.f32.mrb[0].mxu0
        %601 = vmatprep.mubr.f32.mxu0 %v250
        %602 = vmatmul.mubr.f32.gmra.mrb[0].mxu0 %v249
        %v603 = vpop.f32.mrb[0].mxu0
        %v604 = vadd.f32 %v459, %v603
        %v605 = vpop.f32.mrb[0].mxu0
        %606 = vmatprep.mubr.f32.mxu0 %v254
        %607 = vmatmul.mubr.f32.gmra.mrb[0].mxu0 %v253
        %v608 = vpop.f32.mrb[0].mxu0
        %v609 = vadd.f32 %v464, %v608
        %v610 = vpop.f32.mrb[0].mxu0
        %611 = vmatprep.mubr.f32.mxu0 %v258
        %612 = vmatmul.mubr.f32.gmra.mrb[0].mxu0 %v257
        %v613 = vpop.f32.mrb[0].mxu0
        %v614 = vadd.f32 %v469, %v613
        %v615 = vpop.f32.mrb[0].mxu0
        %616 = vmatprep.mubr.f32.mxu0 %v262
        %617 = vmatmul.mubr.f32.gmra.mrb[0].mxu0 %v261
        %v618 = vpop.f32.mrb[0].mxu0
        %v619 = vadd.f32 %v474, %v618
        %v620 = vpop.f32.mrb[0].mxu0
        %621 = vmatprep.mubr.f32.mxu0 %v266
        %622 = vmatmul.mubr.f32.gmra.mrb[0].mxu0 %v265
        %v623 = vpop.f32.mrb[0].mxu0
        %v624 = vadd.f32 %v479, %v623
        %v625 = vpop.f32.mrb[0].mxu0
        %626 = vmatprep.mubr.f32.mxu0 %v270
        %627 = vmatmul.mubr.f32.gmra.mrb[0].mxu0 %v269
        %v628 = vpop.f32.mrb[0].mxu0
        %v629 = vadd.f32 %v484, %v628
        %v630 = vpop.f32.mrb[0].mxu0
        %631 = vmatprep.mubr.f32.mxu0 %v274
        %632 = vmatmul.mubr.f32.gmra.mrb[0].mxu0 %v273
        %v633 = vpop.f32.mrb[0].mxu0
        %v634 = vadd.f32 %v489, %v633
        %v635 = vpop.f32.mrb[0].mxu0
        %636 = vmatprep.mubr.f32.mxu0 %v278
        %637 = vmatmul.mubr.f32.gmra.mrb[0].mxu0 %v277
        %v638 = vpop.f32.mrb[0].mxu0
        %v639 = vadd.f32 %v494, %v638
        %v640 = vpop.f32.mrb[0].mxu0
        %641 = vmatprep.mubr.f32.mxu0 %v282
        %642 = vmatmul.mubr.f32.gmra.mrb[0].mxu0 %v281
        %v643 = vpop.f32.mrb[0].mxu0
        %v644 = vadd.f32 %v499, %v643
        %v645 = vpop.f32.mrb[0].mxu0
        %646 = vmatprep.mubr.f32.mxu0 %v286
        %647 = vmatmul.mubr.f32.gmra.mrb[0].mxu0 %v285
        %v648 = vpop.f32.mrb[0].mxu0
        %v649 = vadd.f32 %v504, %v648
        %v650 = vpop.f32.mrb[0].mxu0
        %651 = vmatprep.mubr.f32.mxu0 %v290
        %652 = vmatmul.mubr.f32.gmra.mrb[0].mxu0 %v289
        %v653 = vpop.f32.mrb[0].mxu0
        %v654 = vadd.f32 %v509, %v653
        %v655 = vpop.f32.mrb[0].mxu0
        %656 = vmatprep.mubr.f32.mxu0 %v294
        %657 = vmatmul.mubr.f32.gmra.mrb[0].mxu0 %v293
        %v658 = vpop.f32.mrb[0].mxu0
        %v659 = vadd.f32 %v514, %v658
        %v660 = vpop.f32.mrb[0].mxu0
        %661 = vmatprep.mubr.f32.mxu0 %v298
        %662 = vmatmul.mubr.f32.gmra.mrb[0].mxu0 %v297
        %v663 = vpop.f32.mrb[0].mxu0
        %v664 = vadd.f32 %v519, %v663
        %v665 = vpop.f32.mrb[0].mxu0
        %666 = vmatprep.mubr.f32.mxu0 %v302
        %667 = vmatmul.mubr.f32.gmra.mrb[0].mxu0 %v301
        %v668 = vpop.f32.mrb[0].mxu0
        %v669 = vadd.f32 %v524, %v668
        %v670 = vpop.f32.mrb[0].mxu0
        %671 = vmatprep.mubr.f32.mxu0 %v306
        %672 = vmatmul.mubr.f32.gmra.mrb[0].mxu0 %v305
        %v673 = vpop.f32.mrb[0].mxu0
        %v674 = vadd.f32 %v529, %v673
        %v675 = vpop.f32.mrb[0].mxu0
        %676 = vdwg.mxu0
        %v677 = vadd.f32 %v371, %v599
        %v678 = vadd.f32 %v372, %v604
        %v679 = vadd.f32 %v373, %v609
        %v680 = vadd.f32 %v374, %v614
        %v681 = vadd.f32 %v375, %v619
        %v682 = vadd.f32 %v376, %v624
        %v683 = vadd.f32 %v377, %v629
        %v684 = vadd.f32 %v378, %v634
        %v685 = vadd.f32 %v379, %v639
        %v686 = vadd.f32 %v380, %v644
        %v687 = vadd.f32 %v381, %v649
        %v688 = vadd.f32 %v382, %v654
        %v689 = vadd.f32 %v383, %v659
        %v690 = vadd.f32 %v384, %v664
        %v691 = vadd.f32 %v385, %v669
        %v692 = vadd.f32 %v386, %v674
        %693 = vst [vmem:[#allocation2] sm:$0xff] %v677
        %694 = vst [vmem:[#allocation2 + $0x8] sm:$0xff] %v678
        %695 = vst [vmem:[#allocation2 + $0x10] sm:$0xff] %v679
        %696 = vst [vmem:[#allocation2 + $0x18] sm:$0xff] %v680
        %697 = vst [vmem:[#allocation2 + $0x20] sm:$0xff] %v681
        %698 = vst [vmem:[#allocation2 + $0x28] sm:$0xff] %v682
        %699 = vst [vmem:[#allocation2 + $0x30] sm:$0xff] %v683
        %700 = vst [vmem:[#allocation2 + $0x38] sm:$0xff] %v684
        %701 = vst [vmem:[#allocation2 + $0x40] sm:$0xff] %v685
        %702 = vst [vmem:[#allocation2 + $0x48] sm:$0xff] %v686
        %703 = vst [vmem:[#allocation2 + $0x50] sm:$0xff] %v687
        %704 = vst [vmem:[#allocation2 + $0x58] sm:$0xff] %v688
        %705 = vst [vmem:[#allocation2 + $0x60] sm:$0xff] %v689
        %706 = vst [vmem:[#allocation2 + $0x68] sm:$0xff] %v690
        %707 = vst [vmem:[#allocation2 + $0x70] sm:$0xff] %v691
        %708 = vst [vmem:[#allocation2 + $0x78] sm:$0xff] %v692
        %p709 = scmp.eq.s32.totalorder %s27, 3
        // Predicated region
        $region41: #{tpu_custom_call.1} parent=27 // pred_check
          %p710 = pneg %p709
        $region42: #{tpu_custom_call.1} parent=27 // pred_check_branch
          %712 = sbr.rel (%p710) target = $region44
        $region43: #{tpu_custom_call.1} parent=27 // pred_region
          %v713 = vld [vmem:[#allocation2] sm:$0xff]
          %v714 = vld [vmem:[#allocation2 + $0x8] sm:$0xff]
          %v715 = vld [vmem:[#allocation2 + $0x10] sm:$0xff]
          %v716 = vld [vmem:[#allocation2 + $0x18] sm:$0xff]
          %v717 = vld [vmem:[#allocation2 + $0x20] sm:$0xff]
          %v718 = vld [vmem:[#allocation2 + $0x28] sm:$0xff]
          %v719 = vld [vmem:[#allocation2 + $0x30] sm:$0xff]
          %v720 = vld [vmem:[#allocation2 + $0x38] sm:$0xff]
          %v721 = vld [vmem:[#allocation2 + $0x40] sm:$0xff]
          %v722 = vld [vmem:[#allocation2 + $0x48] sm:$0xff]
          %v723 = vld [vmem:[#allocation2 + $0x50] sm:$0xff]
          %v724 = vld [vmem:[#allocation2 + $0x58] sm:$0xff]
          %v725 = vld [vmem:[#allocation2 + $0x60] sm:$0xff]
          %v726 = vld [vmem:[#allocation2 + $0x68] sm:$0xff]
          %v727 = vld [vmem:[#allocation2 + $0x70] sm:$0xff]
          %v728 = vld [vmem:[#allocation2 + $0x78] sm:$0xff]
          %729 = vst [vmem:[%s218] sm:$0xff] %v713
          %730 = vst [vmem:[%s218 + $0x8] sm:$0xff] %v714
          %731 = vst [vmem:[%s218 + $0x10] sm:$0xff] %v715
          %732 = vst [vmem:[%s218 + $0x18] sm:$0xff] %v716
          %733 = vst [vmem:[%s218 + $0x20] sm:$0xff] %v717
          %734 = vst [vmem:[%s218 + $0x28] sm:$0xff] %v718
          %735 = vst [vmem:[%s218 + $0x30] sm:$0xff] %v719
          %736 = vst [vmem:[%s218 + $0x38] sm:$0xff] %v720
          %737 = vst [vmem:[%s218 + $0x40] sm:$0xff] %v721
          %738 = vst [vmem:[%s218 + $0x48] sm:$0xff] %v722
          %739 = vst [vmem:[%s218 + $0x50] sm:$0xff] %v723
          %740 = vst [vmem:[%s218 + $0x58] sm:$0xff] %v724
          %741 = vst [vmem:[%s218 + $0x60] sm:$0xff] %v725
          %742 = vst [vmem:[%s218 + $0x68] sm:$0xff] %v726
          %743 = vst [vmem:[%s218 + $0x70] sm:$0xff] %v727
          %744 = vst [vmem:[%s218 + $0x78] sm:$0xff] %v728
        $region44: #{tpu_custom_call.1} parent=27 // pred_fallthru
          _
        %s745 = sand.u32 %s96, 1
        %s746 = scalar_lea.sflag [#allocation5], %s745
        %s747 = sand.u32 %s96, 1
        %s748 = smul.addr %s747, 128
        %s749 = scalar_lea.vmem [#allocation8], %s748
        // Predicated region
        $region45: #{tpu_custom_call.1} parent=27 // pred_check
          %p750 = pneg %p106
        $region46: #{tpu_custom_call.1} parent=27 // pred_check_branch
          %752 = sbr.rel (%p750) target = $region48
        $region47: #{tpu_custom_call.1} parent=27 // pred_region
          %s753 = smul.u32 16, %s26
          %s755 = ssub.s32 2048, 2048
          %756 = vsyncadd %s746, %s755
          %s757 = smul.addr %s753, 128
          %s758 = scalar_lea.hbm %s2, %s757
          %s759 = sshll.u32 %s749, 4
          %s760 = int_to_ptr.vmem [resolvable:$true] %s759
          %765 = dma.vmem_to_hbm [thread:$0]  %s760, 2048, %s758, %s746, 128, 128, 8
        $region48: #{tpu_custom_call.1} parent=27 // pred_fallthru
          _
      $region28: #{tpu_custom_call.1} parent=5 // pred_fallthru
        _
      %p766 = scmp.le.s32.totalorder 2, %s17
      // Predicated region
      $region49: #{tpu_custom_call.1} parent=5 // pred_check
        %p767 = pneg %p766
      $region50: #{tpu_custom_call.1} parent=5 // pred_check_branch
        %769 = sbr.rel (%p767) target = $region52
      $region51: #{tpu_custom_call.1} parent=5 // pred_region
        %s770 = ssub.s32 %s17, 2
        // Predicated region
        $region53: #{tpu_custom_call.1} parent=51 // pred_check
          %p771 = pneg %p112
        $region54: #{tpu_custom_call.1} parent=51 // pred_check_branch
          %773 = sbr.rel (%p771) target = $region56
        $region55: #{tpu_custom_call.1} parent=51 // pred_region
          %s774 = sand.u32 %s97, 1
          %s775 = scalar_lea.sflag [#allocation5], %s774
          %s776 = sand.u32 %s97, 1
          %s777 = smul.addr %s776, 128
          %s778 = scalar_lea.vmem [#allocation8], %s777
          %779 = dma.done %s775, 2048
        $region56: #{tpu_custom_call.1} parent=51 // pred_fallthru
          _
      $region52: #{tpu_custom_call.1} parent=5 // pred_fallthru
        _
    $region6: #{tpu_custom_call.1} parent=1 // loop_footer
      %s21 = sadd.s32 1, %s17
    $region7: #{tpu_custom_call.1} parent=1 // loop_footer_branch
      %16 = sbr.rel target = $region3
    $region8: #{tpu_custom_call.1} parent=1 // loop_exit
      _
    %780 = vsyncpa [#allocation4], 1
    %s781 = scalar_lea.sflag [#allocation4], 1
    %782 = vsyncpa %s781, 1
    %783 = vsyncpa [#allocation7], 1
    %s784 = scalar_lea.sflag [#allocation7], 1
    %785 = vsyncpa %s784, 1
    %786 = vsyncpa [#allocation5], 1
    %s787 = scalar_lea.sflag [#allocation5], 1
    %788 = vsyncpa %s787, 1

</llo_original>
